<compile_context>
chip_gen: v5e
topology: v5e:2x2
jax: 0.10.0
libtpu: 0.0.40
codegen_flags: <defaults>
</compile_context>

<pallas_src>
import math
from functools import partial

import jax
import jax.numpy as jnp
from jax import lax
from jax.experimental import pallas as pl
from jax.experimental.pallas import tpu as pltpu


def _round_up(x: int, m: int) -> int:
    return ((x + m - 1) // m) * m


def make_fixed_embedding_weight(c_in: int, d_model: int) -> jnp.ndarray:
    """Deterministic sinusoidal table, identical to the PyTorch __init__."""
    position = jnp.arange(c_in, dtype=jnp.float32)[:, None]                 # (c_in, 1)
    div_term = jnp.exp(
        jnp.arange(0, d_model, 2, dtype=jnp.float32) * -(math.log(10000.0) / d_model)
    )
    w = jnp.zeros((c_in, d_model), dtype=jnp.float32)
    w = w.at[:, 0::2].set(jnp.sin(position * div_term))
    # guard odd d_model (the PyTorch original would error there)
    w = w.at[:, 1::2].set(jnp.cos(position * div_term[: d_model // 2]))
    return w


def _gather_kernel(ids_ref, tbl_ref, o_ref, *, c_in: int, reps: int, k_pad: int):
    """One-hot (iota compare) x block-diagonal table matmul on the MXU."""
    # In-kernel clamp: out-of-range ids map to the nearest valid row (documented
    # semantic difference vs. nn.Embedding, which would raise).
    ids = jnp.clip(ids_ref[...], 0, c_in - 1)                     # (r_blk, reps) int32
    r_blk = o_ref.shape[0]
    lane = lax.broadcasted_iota(jnp.int32, (r_blk, k_pad), 1)     # lane index
    onehot = jnp.zeros((r_blk, k_pad), jnp.float32)
    # reps is tiny & static (<=16); each sub-token selects a disjoint k-range, so a
    # sum of compares yields the combined one-hot in one pass.
    for j in range(reps):
        fid = ids[:, j:j + 1] + j * c_in                          # (r_blk, 1)
        onehot = onehot + (lane == fid).astype(jnp.float32)       # 1 VPU cmp per vreg
    # MXU gather: (r_blk, k_pad) @ (k_pad, lanes) -> lane-dense output block.
    o_ref[...] = jnp.dot(onehot, tbl_ref[...], preferred_element_type=jnp.float32)


def fixed_embedding_lookup(weight: jnp.ndarray, x: jnp.ndarray, *,
                           block_rows: int = 2048,
                           use_pallas: bool | None = None) -> jnp.ndarray:
    """Pallas equivalent of FixedEmbedding.forward(x) == weight[x]."""
    c_in, d_model = weight.shape
    ids = x.reshape(-1).astype(jnp.int32)
    n = ids.shape[0]

    # Tiny inputs: pallas_call launch overhead dwarfs the work; use fused XLA gather.
    if use_pallas is None:
        use_pallas = n >= 4096
    if not use_pallas:
        out = jnp.take(weight, jnp.clip(ids, 0, c_in - 1), axis=0)
        return out.reshape(x.shape + (d_model,))

    packed = (d_model < 128) and (128 % d_model == 0)
    if packed:
        # reps tokens per 128-lane output row; block-diagonal table so one matmul
        # writes all reps sub-embeddings of a packed row.
        reps = 128 // d_model
        lanes = 128
        table = jnp.kron(jnp.eye(reps, dtype=jnp.float32), weight.astype(jnp.float32))
    else:
        reps = 1
        lanes = _round_up(d_model, 128)
        table = jnp.pad(weight.astype(jnp.float32), ((0, 0), (0, lanes - d_model)))

    k = reps * c_in
    k_pad = _round_up(k, 128)                     # lane-friendly contraction dim
    table = jnp.pad(table, ((0, k_pad - k), (0, 0)))

    # Row blocking: big blocks to amortize ~0.35us/step overhead, but keep >=2 grid
    # steps on large inputs so ("parallel",) can shard across v7x's two TensorCores.
    r_raw = max(-(-n // reps), 1)
    if r_raw >= 16:
        r_blk = min(block_rows, _round_up(-(-r_raw // 2), 8))
    else:
        r_blk = _round_up(r_raw, 8)
    # VMEM guard: keep the in-kernel one-hot (r_blk x k_pad f32) under ~8 MiB.
    max_rows = max(8, (((8 << 20) // (k_pad * 4)) // 8) * 8)
    r_blk = min(r_blk, max_rows)
    r_total = _round_up(r_raw, r_blk)
    n_pad = r_total * reps

    ids2 = jnp.pad(ids, (0, n_pad - n)).reshape(r_total, reps)    # narrow int32 ids

    grid = (r_total // r_blk,)
    flops = 2 * r_total * k_pad * lanes
    bytes_accessed = int(ids2.size * 4 + table.size * 4 + r_total * lanes * 4)

    kernel = partial(_gather_kernel, c_in=c_in, reps=reps, k_pad=k_pad)

    out = pl.pallas_call(
        kernel,
        out_shape=jax.ShapeDtypeStruct((r_total, lanes), jnp.float32),
        grid_spec=pltpu.PrefetchScalarGridSpec(
            num_scalar_prefetch=0,
            grid=grid,
            in_specs=[
                pl.BlockSpec((r_blk, reps), lambda i: (i, 0)),     # narrow ids block
                pl.BlockSpec((k_pad, lanes), lambda i: (0, 0)),    # VMEM-resident table
            ],
            out_specs=pl.BlockSpec((r_blk, lanes), lambda i: (i, 0)),  # lane-dense store
        ),
        compiler_params=pltpu.CompilerParams(
            dimension_semantics=("parallel",),    # independent row blocks -> 2 TCs on v7x
        ),
        cost_estimate=pl.CostEstimate(
            flops=flops, transcendentals=0, bytes_accessed=bytes_accessed),
    )(ids2, table)

    if packed:
        out = out.reshape(n_pad, d_model)[:n]
    else:
        out = out[:n, :d_model]
    return out.reshape(x.shape + (d_model,))


if __name__ == "__main__":
    # Small shapes consistent with the module (time-feature vocab, small d_model).
    c_in, d_model = 16, 32
    B, L = 2, 8

    key = jax.random.PRNGKey(0)
    x = jax.random.randint(key, (B, L), minval=0, maxval=c_in, dtype=jnp.int32)
    weight = make_fixed_embedding_weight(c_in, d_model)
    ref = weight[x]

    # Force the Pallas path even at this small size (packed path: 4 tokens per row).
    out = fixed_embedding_lookup(weight, x, use_pallas=True)
    out = jax.block_until_ready(out)
    assert out.shape == (B, L, d_model) and out.dtype == jnp.float32
    assert jnp.allclose(out, ref, atol=1e-6), "packed-path mismatch vs reference"

    # Also exercise the unpacked (d_model >= 128) path with a >=2-step grid.
    x2 = jax.random.randint(jax.random.PRNGKey(0), (2, 2048), 0, c_in, dtype=jnp.int32)
    w2 = make_fixed_embedding_weight(c_in, 128)
    out2 = jax.block_until_ready(fixed_embedding_lookup(w2, x2, use_pallas=True))
    assert jnp.allclose(out2, w2[x2], atol=1e-6), "unpacked-path mismatch vs reference"

    # Auto path (tiny n -> fused XLA gather fallback).
    out3 = jax.block_until_ready(fixed_embedding_lookup(weight, x))
    assert jnp.allclose(out3, ref, atol=1e-6)

    print("KERNEL_OK")
</pallas_src>

<mosaic_0001>
module attributes {stable_mosaic.version = 11 : i64} {
  func.func @_gather_kernel(%arg0: i32, %arg1: memref<8x4xi32, #tpu.memory_space<vmem>>, %arg2: memref<128x128xf32, #tpu.memory_space<vmem>>, %arg3: memref<8x128xf32, #tpu.memory_space<vmem>>) attributes {dimension_semantics = [#tpu.dimension_semantics<parallel>], iteration_bounds = array<i64: 1>, scalar_prefetch = 0 : i64, scratch_operands = 0 : i64, tpu.core_type = #tpu.core_type<tc>, window_params = [{transform_indices = @transform_0, window_bounds = array<i64: 8, 4>}, {pipeline_mode = #tpu.pipeline_mode<synchronous>, transform_indices = @transform_1, window_bounds = array<i64: 128, 128>}, {transform_indices = @transform_2, window_bounds = array<i64: 8, 128>}]} {
    %c0 = arith.constant 0 : index
    %c0_0 = arith.constant 0 : index
    %0 = vector.load %arg1[%c0, %c0_0] : memref<8x4xi32, #tpu.memory_space<vmem>>, vector<8x4xi32>
    %c0_i32 = arith.constant 0 : i32
    %c15_i32 = arith.constant 15 : i32
    %1 = vector.broadcast %c0_i32 : i32 to vector<8x4xi32>
    %2 = arith.maxsi %1, %0 : vector<8x4xi32>
    %3 = vector.broadcast %c15_i32 : i32 to vector<8x4xi32>
    %4 = arith.minsi %3, %2 : vector<8x4xi32>
    %5 = tpu.iota {dimensions = array<i32: 1>} : vector<8x128xi32>
    %cst = arith.constant 0.000000e+00 : f32
    %6 = vector.broadcast %cst : f32 to vector<8x128xf32>
    %7 = vector.extract_strided_slice %4 {offsets = [0, 0], sizes = [8, 1], strides = [1, 1]} : vector<8x4xi32> to vector<8x1xi32>
    %c0_i32_1 = arith.constant 0 : i32
    %8 = vector.broadcast %c0_i32_1 : i32 to vector<8x1xi32>
    %9 = arith.addi %7, %8 : vector<8x1xi32>
    %10 = vector.broadcast %9 : vector<8x1xi32> to vector<8x128xi32>
    %11 = arith.cmpi eq, %5, %10 : vector<8x128xi32>
    %12 = arith.extui %11 : vector<8x128xi1> to vector<8x128xi32>
    %13 = arith.sitofp %12 : vector<8x128xi32> to vector<8x128xf32>
    %14 = arith.addf %6, %13 : vector<8x128xf32>
    %15 = vector.extract_strided_slice %4 {offsets = [0, 1], sizes = [8, 1], strides = [1, 1]} : vector<8x4xi32> to vector<8x1xi32>
    %c16_i32 = arith.constant 16 : i32
    %16 = vector.broadcast %c16_i32 : i32 to vector<8x1xi32>
    %17 = arith.addi %15, %16 : vector<8x1xi32>
    %18 = vector.broadcast %17 : vector<8x1xi32> to vector<8x128xi32>
    %19 = arith.cmpi eq, %5, %18 : vector<8x128xi32>
    %20 = arith.extui %19 : vector<8x128xi1> to vector<8x128xi32>
    %21 = arith.sitofp %20 : vector<8x128xi32> to vector<8x128xf32>
    %22 = arith.addf %14, %21 : vector<8x128xf32>
    %23 = vector.extract_strided_slice %4 {offsets = [0, 2], sizes = [8, 1], strides = [1, 1]} : vector<8x4xi32> to vector<8x1xi32>
    %c32_i32 = arith.constant 32 : i32
    %24 = vector.broadcast %c32_i32 : i32 to vector<8x1xi32>
    %25 = arith.addi %23, %24 : vector<8x1xi32>
    %26 = vector.broadcast %25 : vector<8x1xi32> to vector<8x128xi32>
    %27 = arith.cmpi eq, %5, %26 : vector<8x128xi32>
    %28 = arith.extui %27 : vector<8x128xi1> to vector<8x128xi32>
    %29 = arith.sitofp %28 : vector<8x128xi32> to vector<8x128xf32>
    %30 = arith.addf %22, %29 : vector<8x128xf32>
    %31 = vector.extract_strided_slice %4 {offsets = [0, 3], sizes = [8, 1], strides = [1, 1]} : vector<8x4xi32> to vector<8x1xi32>
    %c48_i32 = arith.constant 48 : i32
    %32 = vector.broadcast %c48_i32 : i32 to vector<8x1xi32>
    %33 = arith.addi %31, %32 : vector<8x1xi32>
    %34 = vector.broadcast %33 : vector<8x1xi32> to vector<8x128xi32>
    %35 = arith.cmpi eq, %5, %34 : vector<8x128xi32>
    %36 = arith.extui %35 : vector<8x128xi1> to vector<8x128xi32>
    %37 = arith.sitofp %36 : vector<8x128xi32> to vector<8x128xf32>
    %38 = arith.addf %30, %37 : vector<8x128xf32>
    %c0_2 = arith.constant 0 : index
    %c0_3 = arith.constant 0 : index
    %39 = vector.load %arg2[%c0_2, %c0_3] : memref<128x128xf32, #tpu.memory_space<vmem>>, vector<128x128xf32>
    %cst_4 = arith.constant dense<0.000000e+00> : vector<8x128xf32>
    %40 = tpu.matmul %38, %39, %cst_4 {dimension_numbers = #tpu.dot_dimension_numbers<[1], [0], [0], [1], [0, 0, 1, 1], [], []>} : vector<8x128xf32>, vector<128x128xf32>, vector<8x128xf32> -> vector<8x128xf32>
    %c0_5 = arith.constant 0 : index
    %c0_6 = arith.constant 0 : index
    %41 = vector.load %arg3[%c0_5, %c0_6] : memref<8x128xf32, #tpu.memory_space<vmem>>, vector<8x128xf32>
    tpu.vector_store %arg3[%c0_5, %c0_6], %40 {strides = array<i32>} : memref<8x128xf32, #tpu.memory_space<vmem>>, vector<8x128xf32>,
    return
  }
  func.func @transform_0(%arg0: i32) -> (i32, i32) {
    %c0_i32 = arith.constant 0 : i32
    %c0_i32_0 = arith.constant 0 : i32
    return %arg0, %c0_i32 : i32, i32
  }
  func.func @transform_1(%arg0: i32) -> (i32, i32) {
    %c0_i32 = arith.constant 0 : i32
    %c0_i32_0 = arith.constant 0 : i32
    %c0_i32_1 = arith.constant 0 : i32
    return %c0_i32, %c0_i32_0 : i32, i32
  }
  func.func @transform_2(%arg0: i32) -> (i32, i32) {
    %c0_i32 = arith.constant 0 : i32
    %c0_i32_0 = arith.constant 0 : i32
    return %arg0, %c0_i32 : i32, i32
  }
}

</mosaic_0001>

<llo_original>
// kernel: tpu_custom_call.1
$region0: #{tpu_custom_call.1}
  #allocation0 [shape = 'u32[]', space=smem, size = 0x4, offset = 0x4, fixed_abs, tag = 'smem constant byte address 0x4 - core index']
  #allocation1 [shape = 'u32[72,128]{1,0:T(1,128)}', space=vmem, size = 0x9000, scoped, tag = 'internal scratch']
  %s0 = inlined_call_operand.vmem [shape: s32[8,4], index: 0, kind: input, shape index: {}]
  %s1 = inlined_call_operand.hbm [shape: f32[128,128], index: 1, kind: input, shape index: {}]
  %s2 = inlined_call_operand.hbm [shape: f32[8,128], index: 2, kind: output, shape index: {}]
  %s3 = sld [smem:[#allocation0]]
  $region22: #{tpu_custom_call.1} parent=0
    _
  %s5 = ssub.s32 1, %s3
  %s6 = scalar_select 0, %s5, %s3
  $region1: #{tpu_custom_call.1} parent=0
    #allocation2 [shape = 'u8[65536]{0}', space=vmem, size = 0x10000, scoped, tag = 'input window, operand 1, single buffered']
    #allocation3 [shape = 's32[1]{0}', space=sflag, size = 0x4, scoped, tag = 'scoped memory for tpu_custom_call.1']
    #allocation4 [shape = 's32[1]{0}', space=sflag, size = 0x4, scoped, tag = 'scoped memory for tpu_custom_call.1']
    #allocation5 [shape = 'u8[4096]{0}', space=vmem, size = 0x1000, scoped, tag = 'output window, operand 0, single buffered']
    %7 = vsyncpa [#allocation3], 0
    %8 = vsyncpa [#allocation4], 0
    // Predicated region
    $region2: #{tpu_custom_call.1} parent=1 // pred_check
      _
    $region3: #{tpu_custom_call.1} parent=1 // pred_check_branch
      %10 = sbr.rel (0) target = $region5
    $region4: #{tpu_custom_call.1} parent=1 // pred_region
      _
    $region5: #{tpu_custom_call.1} parent=1 // pred_fallthru
      _
    // Predicated region
    $region6: #{tpu_custom_call.1} parent=1 // pred_check
      _
    $region7: #{tpu_custom_call.1} parent=1 // pred_check_branch
      %12 = sbr.rel (0) target = $region9
    $region8: #{tpu_custom_call.1} parent=1 // pred_region
      %14 = vsyncadd [#allocation3], 0
      %s15 = sshll.u32 %s1, 4
      %s16 = int_to_ptr.hbm [resolvable:$true] %s15
      %s17 = sshll.u32 [#allocation2], 4
      %s18 = int_to_ptr.vmem [resolvable:$true] %s17
      %23 = dma.hbm_to_vmem [thread:$0]  %s16, 2048, %s18, [#allocation3], 128, 128, 8
    $region9: #{tpu_custom_call.1} parent=1 // pred_fallthru
      _
    // Predicated region
    $region10: #{tpu_custom_call.1} parent=1 // pred_check
      _
    $region11: #{tpu_custom_call.1} parent=1 // pred_check_branch
      %25 = sbr.rel (0) target = $region13
    $region12: #{tpu_custom_call.1} parent=1 // pred_region
      %27 = dma.done [#allocation3], 2048
    $region13: #{tpu_custom_call.1} parent=1 // pred_fallthru
      _
    %v28 = vld [vmem:[%s0] sm:$0xff]
    %vm29 = vcmp.gt.s32.totalorder %v28, 0
    %v30 = vsel %vm29, %v28, 0
    %vm31 = vcmp.lt.s32.totalorder %v30, 15
    %v32 = vsel %vm31, %v30, 15
    %v33 = vlaneseq
    %v34 = vand.u32 %v33, 127
    %35 = vset.pattern.permute.xlu0 0
    %36 = vperm.xlu0 %35, %v32
    %v37 = vpop.permute.xlu0 %36
    %vm38 = vcmp.eq.s32.totalorder %v34, %v37
    %v39 = vsel %vm38, 1, 0
    %v40 = vcvt.s32.f32 %v39
    %v41 = vadd.f32 %v40, 0.0
    %v42 = vadd.s32 %v32, 16
    %43 = vset.pattern.permute.xlu0 1
    %44 = vperm.xlu0 %43, %v42
    %v45 = vpop.permute.xlu0 %44
    %vm46 = vcmp.eq.s32.totalorder %v34, %v45
    %v47 = vsel %vm46, 1, 0
    %v48 = vcvt.s32.f32 %v47
    %v49 = vadd.f32 %v41, %v48
    %v50 = vadd.s32 %v32, 32
    %51 = vset.pattern.permute.xlu0 2
    %52 = vperm.xlu0 %51, %v50
    %v53 = vpop.permute.xlu0 %52
    %vm54 = vcmp.eq.s32.totalorder %v34, %v53
    %v55 = vsel %vm54, 1, 0
    %v56 = vcvt.s32.f32 %v55
    %v57 = vadd.f32 %v49, %v56
    %v58 = vadd.s32 %v32, 48
    %59 = vset.pattern.permute.xlu0 3
    %60 = vperm.xlu0 %59, %v58
    %v61 = vpop.permute.xlu0 %60
    %vm62 = vcmp.eq.s32.totalorder %v34, %v61
    %v63 = vsel %vm62, 1, 0
    %v64 = vcvt.s32.f32 %v63
    %v65 = vadd.f32 %v57, %v64
    %v66 = vld [vmem:[#allocation2] sm:$0xff]
    %v67 = vld [vmem:[#allocation2 + $0x8] sm:$0xff]
    %v68 = vld [vmem:[#allocation2 + $0x10] sm:$0xff]
    %v69 = vld [vmem:[#allocation2 + $0x18] sm:$0xff]
    %v70 = vld [vmem:[#allocation2 + $0x20] sm:$0xff]
    %v71 = vld [vmem:[#allocation2 + $0x28] sm:$0xff]
    %v72 = vld [vmem:[#allocation2 + $0x30] sm:$0xff]
    %v73 = vld [vmem:[#allocation2 + $0x38] sm:$0xff]
    %v74 = vld [vmem:[#allocation2 + $0x40] sm:$0xff]
    %v75 = vld [vmem:[#allocation2 + $0x48] sm:$0xff]
    %v76 = vld [vmem:[#allocation2 + $0x50] sm:$0xff]
    %v77 = vld [vmem:[#allocation2 + $0x58] sm:$0xff]
    %v78 = vld [vmem:[#allocation2 + $0x60] sm:$0xff]
    %v79 = vld [vmem:[#allocation2 + $0x68] sm:$0xff]
    %v80 = vld [vmem:[#allocation2 + $0x70] sm:$0xff]
    %v81 = vld [vmem:[#allocation2 + $0x78] sm:$0xff]
    %82 = vmatpush.msra.mxu0 %v81
    %83 = vmatpush.msra.mxu0 %v80
    %84 = vmatpush.msra.mxu0 %v79
    %85 = vmatpush.msra.mxu0 %v78
    %86 = vmatpush.msra.mxu0 %v77
    %87 = vmatpush.msra.mxu0 %v76
    %88 = vmatpush.msra.mxu0 %v75
    %89 = vmatpush.msra.mxu0 %v74
    %90 = vmatpush.msra.mxu0 %v73
    %91 = vmatpush.msra.mxu0 %v72
    %92 = vmatpush.msra.mxu0 %v71
    %93 = vmatpush.msra.mxu0 %v70
    %94 = vmatpush.msra.mxu0 %v69
    %95 = vmatpush.msra.mxu0 %v68
    %96 = vmatpush.msra.mxu0 %v67
    %97 = vmatpush.msra.mxu0 %v66
    %98 = vmatmul.f32.gmra.mxu0 %v65
    %v99 = vpop.f32.mrf.mxu0
    %v100 = vadd.f32 0.0, %v99
    %101 = vdwg.mxu0
    %102 = vst [vmem:[#allocation5] sm:$0xff] %v100
    // Predicated region
    $region14: #{tpu_custom_call.1} parent=1 // pred_check
      _
    $region15: #{tpu_custom_call.1} parent=1 // pred_check_branch
      %104 = sbr.rel (0) target = $region17
    $region16: #{tpu_custom_call.1} parent=1 // pred_region
      %106 = vsyncadd [#allocation4], 0
      %s108 = sshll.u32 [#allocation5], 4
      %s109 = int_to_ptr.vmem [resolvable:$true] %s108
      %s110 = sshll.u32 %s2, 4
      %s111 = int_to_ptr.hbm [resolvable:$true] %s110
      %113 = dma.vmem_to_hbm [thread:$0]  %s109, 128, %s111, [#allocation4]
    $region17: #{tpu_custom_call.1} parent=1 // pred_fallthru
      _
    // Predicated region
    $region18: #{tpu_custom_call.1} parent=1 // pred_check
      _
    $region19: #{tpu_custom_call.1} parent=1 // pred_check_branch
      %115 = sbr.rel (0) target = $region21
    $region20: #{tpu_custom_call.1} parent=1 // pred_region
      %117 = dma.done [#allocation4], 128
    $region21: #{tpu_custom_call.1} parent=1 // pred_fallthru
      _
    %118 = vsyncpa [#allocation3], 1
    %119 = vsyncpa [#allocation4], 1

</llo_original>
